<compile_context>
chip_gen: v6e
topology: v6e:2x2x1
jax: 0.10.0
libtpu: 0.0.40
codegen_flags: <defaults>
</compile_context>

<pallas_src>
import functools

import jax
import jax.numpy as jnp
from jax.experimental import pallas as pl
from jax.experimental.pallas import tpu as pltpu

D_MODEL = 32
MAX_VALUE = 512.0
LN_EPS = 1e-5
LANES = 128


def _round_up(a, m):
    return ((a + m - 1) // m) * m


def _cve_kernel(x_ref, w1p_ref, w2bd_ref, sum_ref, exp_ref, params_ref, o_ref):
    # x_ref:      (PACK, tile)  packed token values (transposed, lane-dense)
    # w1p_ref:    (PACK, 128)   block-placed linear1 weight, bf16
    # w2bd_ref:   (128, 128)    block-diagonal linear2 weight (in, out), bf16
    # sum_ref:    (128, PACK)   per-segment averaging (1/d) columns, f32
    # exp_ref:    (PACK, 128)   per-segment 0/1 expansion matrix, f32
    # params_ref: (4, 128)      rows: b1, b2, gamma, beta (each tiled x PACK)
    # o_ref:      (tile, 128)   packed output (PACK tokens per row)
    x = jnp.minimum(x_ref[...], MAX_VALUE)               # clamp(max=max_value)

    # linear1 (in_features=1) + ReLU: contract the PACK axis (lhs dim 0)
    # against the block-placed weight -> (tile, 128).  bf16 operands keep the
    # MXU single-pass; accumulation stays f32.
    h = jax.lax.dot_general(
        x.astype(jnp.bfloat16), w1p_ref[...],
        dimension_numbers=(((0,), (0,)), ((), ())),
        preferred_element_type=jnp.float32)
    h = jnp.maximum(h + params_ref[0:1, :], 0.0)

    # linear2 as a block-diagonal (128,128) matmul: bf16 operands, f32 acc.
    y = jnp.dot(h.astype(jnp.bfloat16), w2bd_ref[...],
                preferred_element_type=jnp.float32)
    y = y + params_ref[1:2, :]

    # LayerNorm over each d-lane segment.  Two independent skinny stat dots
    # (f32 operands, tiny FLOPs) give per-segment mean and E[y^2]; then two
    # tiny expansion dots broadcast mean / rsqrt back across lanes.
    mean_seg = jnp.dot(y, sum_ref[...], preferred_element_type=jnp.float32)
    msq_seg = jnp.dot(y * y, sum_ref[...], preferred_element_type=jnp.float32)
    var_seg = jnp.maximum(msq_seg - mean_seg * mean_seg, 0.0)
    inv_seg = jax.lax.rsqrt(var_seg + LN_EPS)
    mean = jnp.dot(mean_seg, exp_ref[...], preferred_element_type=jnp.float32)
    inv = jnp.dot(inv_seg, exp_ref[...], preferred_element_type=jnp.float32)

    out = (y - mean) * inv * params_ref[2:3, :] + params_ref[3:4, :]
    # TODO(synk): dropout omitted (eval-mode identity; no PRNG path needed).
    o_ref[...] = out.astype(o_ref.dtype)


@functools.partial(jax.jit, static_argnames=("block_rows", "out_dtype"))
def continuous_value_encoder(x, w1, b1, w2, b2, gamma, beta, *,
                             block_rows=4096, out_dtype=jnp.float32):
    """x: (B, S) f32 -> (B, S, d_model).

    w1: (d, 1)  PyTorch nn.Linear(1, d).weight
    b1: (d,)
    w2: (d, d)  PyTorch nn.Linear(d, d).weight, i.e. (out, in) layout
    b2, gamma, beta: (d,)
    block_rows: max packed rows (= PACK tokens each) per grid step.
    out_dtype: set to jnp.bfloat16 if the consumer accepts it (halves the
               dominant HBM write traffic); default keeps module semantics.
    """
    B, S = x.shape
    d = gamma.shape[0]
    assert LANES % d == 0, "d_model must divide 128 for lane packing"
    assert block_rows % LANES == 0
    pack = LANES // d
    N = B * S

    # tile = packed rows per grid step: multiple of 128 (lane-dim of the x
    # block / sublane alignment of the output block), capped so the parallel
    # grid keeps >= 2 steps when possible (v7x has 2 TensorCores).
    n_packed = pl.cdiv(N, pack)
    tile = min(block_rows, _round_up(pl.cdiv(n_packed, 2), LANES))
    n_packed_pad = _round_up(n_packed, tile)
    n_pad = n_packed_pad * pack

    x_flat = x.reshape(-1).astype(jnp.float32)
    if n_pad > N:
        x_flat = jnp.concatenate(
            [x_flat, jnp.zeros((n_pad - N,), jnp.float32)])
    # Transposed packing: x_t[p, r] = token (r*pack + p).  Gives a lane-dense
    # (pack, tile) input block (contiguous DMA, tiny VMEM footprint).
    x_t = x_flat.reshape(n_packed_pad, pack).T

    # ---- lane-dense parameter tensors (wrapper-side, traced once) ----
    w1_vec = w1.reshape(d).astype(jnp.float32)                 # (d,)
    w2_io = w2.astype(jnp.float32).T                           # (in, out)
    eye_p = jnp.eye(pack, dtype=jnp.float32)
    w1p = jnp.kron(eye_p, w1_vec[None, :]).astype(jnp.bfloat16)      # (pack,128)
    w2bd = jnp.kron(eye_p, w2_io).astype(jnp.bfloat16)               # (128,128)
    sum_mat = jnp.kron(eye_p, jnp.full((d, 1), 1.0 / d, jnp.float32))  # (128,pack)
    expand = jnp.kron(eye_p, jnp.ones((1, d), jnp.float32))          # (pack,128)
    params = jnp.stack([
        jnp.tile(b1.astype(jnp.float32), pack),
        jnp.tile(b2.astype(jnp.float32), pack),
        jnp.tile(gamma.astype(jnp.float32), pack),
        jnp.tile(beta.astype(jnp.float32), pack),
    ])                                                               # (4,128)

    grid = (n_packed_pad // tile,)

    out_packed = pl.pallas_call(
        _cve_kernel,
        out_shape=jax.ShapeDtypeStruct((n_packed_pad, LANES), out_dtype),
        grid_spec=pltpu.PrefetchScalarGridSpec(
            num_scalar_prefetch=0,
            grid=grid,
            in_specs=[
                pl.BlockSpec((pack, tile), lambda i: (0, i)),     # x (transposed)
                pl.BlockSpec((pack, LANES), lambda i: (0, 0)),    # w1 packed
                pl.BlockSpec((LANES, LANES), lambda i: (0, 0)),   # w2 block-diag
                pl.BlockSpec((LANES, pack), lambda i: (0, 0)),    # segment avg
                pl.BlockSpec((pack, LANES), lambda i: (0, 0)),    # segment expand
                pl.BlockSpec((4, LANES), lambda i: (0, 0)),       # b1/b2/gamma/beta
            ],
            out_specs=pl.BlockSpec((tile, LANES), lambda i: (i, 0)),
        ),
        compiler_params=pltpu.CompilerParams(
            dimension_semantics=("parallel",),
            vmem_limit_bytes=32 * 1024 * 1024,
        ),
    )(x_t, w1p, w2bd, sum_mat, expand, params)

    out = out_packed.reshape(n_packed_pad * pack, d)
    if n_pad > N:
        # TODO(synk): returning the padded packed layout to the caller would
        # avoid this extra read+write of the output when padding is present.
        out = out[:N]
    return out.reshape(B, S, d)


def _reference(x, w1, b1, w2, b2, gamma, beta):
    # Pure-JAX f32 reference with PyTorch weight layouts.
    xc = jnp.minimum(x[..., None], MAX_VALUE)
    h = jnp.maximum(xc * w1.reshape(-1)[None, None, :] + b1, 0.0)
    y = jnp.einsum("bsk,dk->bsd", h, w2) + b2      # nn.Linear: y = h @ W.T + b
    mean = jnp.mean(y, axis=-1, keepdims=True)
    var = jnp.mean((y - mean) ** 2, axis=-1, keepdims=True)
    return (y - mean) * jax.lax.rsqrt(var + LN_EPS) * gamma + beta


if __name__ == "__main__":
    key = jax.random.PRNGKey(0)
    k_x, k_w1, k_b1, k_w2, k_b2, k_g, k_be = jax.random.split(key, 7)

    B, S, d = 2, 8, D_MODEL

    # Deterministic synthetic parameters in PyTorch shapes.
    x = jax.random.uniform(k_x, (B, S), jnp.float32, minval=0.0, maxval=1000.0)
    w1 = jax.random.normal(k_w1, (d, 1), jnp.float32) * 0.5        # Linear(1, d).weight
    b1 = jax.random.normal(k_b1, (d,), jnp.float32) * 0.1
    w2 = jax.random.normal(k_w2, (d, d), jnp.float32) * (1.0 / d ** 0.5)  # (out, in)
    b2 = jax.random.normal(k_b2, (d,), jnp.float32) * 0.1
    gamma = 1.0 + 0.1 * jax.random.normal(k_g, (d,), jnp.float32)
    beta = 0.1 * jax.random.normal(k_be, (d,), jnp.float32)

    out = continuous_value_encoder(x, w1, b1, w2, b2, gamma, beta)
    out = jax.block_until_ready(out)

    ref = _reference(x, w1, b1, w2, b2, gamma, beta)
    assert out.shape == (B, S, d)
    # Tolerance reflects bf16 MXU operands (f32 accumulation); typical error
    # is a few 1e-3, worst-case ~2e-2 on LayerNorm-normalized outputs.
    assert jnp.allclose(out, ref, atol=5e-2, rtol=5e-2), "mismatch vs reference"

    print("KERNEL_OK")
</pallas_src>

<mosaic_0001>
module attributes {stable_mosaic.version = 11 : i64} {
  func.func @_cve_kernel(%arg0: i32, %arg1: memref<4x128xf32, #tpu.memory_space<vmem>>, %arg2: memref<4x128xbf16, #tpu.memory_space<vmem>>, %arg3: memref<128x128xbf16, #tpu.memory_space<vmem>>, %arg4: memref<128x4xf32, #tpu.memory_space<vmem>>, %arg5: memref<4x128xf32, #tpu.memory_space<vmem>>, %arg6: memref<4x128xf32, #tpu.memory_space<vmem>>, %arg7: memref<128x128xf32, #tpu.memory_space<vmem>>) attributes {dimension_semantics = [#tpu.dimension_semantics<parallel>], iteration_bounds = array<i64: 1>, scalar_prefetch = 0 : i64, scratch_operands = 0 : i64, tpu.core_type = #tpu.core_type<tc>, window_params = [{transform_indices = @transform_0, window_bounds = array<i64: 4, 128>}, {pipeline_mode = #tpu.pipeline_mode<synchronous>, transform_indices = @transform_1, window_bounds = array<i64: 4, 128>}, {pipeline_mode = #tpu.pipeline_mode<synchronous>, transform_indices = @transform_2, window_bounds = array<i64: 128, 128>}, {pipeline_mode = #tpu.pipeline_mode<synchronous>, transform_indices = @transform_3, window_bounds = array<i64: 128, 4>}, {pipeline_mode = #tpu.pipeline_mode<synchronous>, transform_indices = @transform_4, window_bounds = array<i64: 4, 128>}, {pipeline_mode = #tpu.pipeline_mode<synchronous>, transform_indices = @transform_5, window_bounds = array<i64: 4, 128>}, {transform_indices = @transform_6, window_bounds = array<i64: 128, 128>}]} {
    %c0 = arith.constant 0 : index
    %c0_0 = arith.constant 0 : index
    %0 = vector.load %arg1[%c0, %c0_0] : memref<4x128xf32, #tpu.memory_space<vmem>>, vector<4x128xf32>
    %cst = arith.constant 5.120000e+02 : f32
    %1 = vector.broadcast %cst : f32 to vector<4x128xf32>
    %2 = arith.minimumf %0, %1 : vector<4x128xf32>
    %3 = arith.truncf %2 : vector<4x128xf32> to vector<4x128xbf16>
    %c0_1 = arith.constant 0 : index
    %c0_2 = arith.constant 0 : index
    %4 = vector.load %arg2[%c0_1, %c0_2] : memref<4x128xbf16, #tpu.memory_space<vmem>>, vector<4x128xbf16>
    %cst_3 = arith.constant dense<0.000000e+00> : vector<128x128xf32>
    %5 = tpu.matmul %3, %4, %cst_3 {dimension_numbers = #tpu.dot_dimension_numbers<[0], [0], [1], [1], [0, 1, 1, 1], [], []>} : vector<4x128xbf16>, vector<4x128xbf16>, vector<128x128xf32> -> vector<128x128xf32>
    %c0_4 = arith.constant 0 : index
    %c0_5 = arith.constant 0 : index
    %6 = vector.load %arg6[%c0_4, %c0_5] : memref<4x128xf32, #tpu.memory_space<vmem>>, vector<1x128xf32>
    %7 = vector.broadcast %6 : vector<1x128xf32> to vector<128x128xf32>
    %8 = arith.addf %5, %7 : vector<128x128xf32>
    %cst_6 = arith.constant 0.000000e+00 : f32
    %9 = vector.broadcast %cst_6 : f32 to vector<128x128xf32>
    %10 = arith.maximumf %8, %9 : vector<128x128xf32>
    %11 = arith.truncf %10 : vector<128x128xf32> to vector<128x128xbf16>
    %c0_7 = arith.constant 0 : index
    %c0_8 = arith.constant 0 : index
    %12 = vector.load %arg3[%c0_7, %c0_8] : memref<128x128xbf16, #tpu.memory_space<vmem>>, vector<128x128xbf16>
    %cst_9 = arith.constant dense<0.000000e+00> : vector<128x128xf32>
    %13 = tpu.matmul %11, %12, %cst_9 {dimension_numbers = #tpu.dot_dimension_numbers<[1], [0], [0], [1], [0, 0, 1, 1], [], []>} : vector<128x128xbf16>, vector<128x128xbf16>, vector<128x128xf32> -> vector<128x128xf32>
    %c1 = arith.constant 1 : index
    %c0_10 = arith.constant 0 : index
    %14 = vector.load %arg6[%c1, %c0_10] : memref<4x128xf32, #tpu.memory_space<vmem>>, vector<1x128xf32>
    %15 = vector.broadcast %14 : vector<1x128xf32> to vector<128x128xf32>
    %16 = arith.addf %13, %15 : vector<128x128xf32>
    %c0_11 = arith.constant 0 : index
    %c0_12 = arith.constant 0 : index
    %17 = vector.load %arg4[%c0_11, %c0_12] : memref<128x4xf32, #tpu.memory_space<vmem>>, vector<128x4xf32>
    %cst_13 = arith.constant dense<0.000000e+00> : vector<128x4xf32>
    %18 = tpu.matmul %16, %17, %cst_13 {dimension_numbers = #tpu.dot_dimension_numbers<[1], [0], [0], [1], [0, 0, 1, 1], [], []>} : vector<128x128xf32>, vector<128x4xf32>, vector<128x4xf32> -> vector<128x4xf32>
    %19 = arith.mulf %16, %16 : vector<128x128xf32>
    %c0_14 = arith.constant 0 : index
    %c0_15 = arith.constant 0 : index
    %20 = vector.load %arg4[%c0_14, %c0_15] : memref<128x4xf32, #tpu.memory_space<vmem>>, vector<128x4xf32>
    %cst_16 = arith.constant dense<0.000000e+00> : vector<128x4xf32>
    %21 = tpu.matmul %19, %20, %cst_16 {dimension_numbers = #tpu.dot_dimension_numbers<[1], [0], [0], [1], [0, 0, 1, 1], [], []>} : vector<128x128xf32>, vector<128x4xf32>, vector<128x4xf32> -> vector<128x4xf32>
    %22 = arith.mulf %18, %18 : vector<128x4xf32>
    %23 = arith.subf %21, %22 : vector<128x4xf32>
    %cst_17 = arith.constant 0.000000e+00 : f32
    %24 = vector.broadcast %cst_17 : f32 to vector<128x4xf32>
    %25 = arith.maximumf %23, %24 : vector<128x4xf32>
    %cst_18 = arith.constant 9.99999974E-6 : f32
    %26 = vector.broadcast %cst_18 : f32 to vector<128x4xf32>
    %27 = arith.addf %25, %26 : vector<128x4xf32>
    %28 = math.rsqrt %27 : vector<128x4xf32>
    %c0_19 = arith.constant 0 : index
    %c0_20 = arith.constant 0 : index
    %29 = vector.load %arg5[%c0_19, %c0_20] : memref<4x128xf32, #tpu.memory_space<vmem>>, vector<4x128xf32>
    %cst_21 = arith.constant dense<0.000000e+00> : vector<128x128xf32>
    %30 = tpu.matmul %18, %29, %cst_21 {dimension_numbers = #tpu.dot_dimension_numbers<[1], [0], [0], [1], [0, 0, 1, 1], [], []>} : vector<128x4xf32>, vector<4x128xf32>, vector<128x128xf32> -> vector<128x128xf32>
    %c0_22 = arith.constant 0 : index
    %c0_23 = arith.constant 0 : index
    %31 = vector.load %arg5[%c0_22, %c0_23] : memref<4x128xf32, #tpu.memory_space<vmem>>, vector<4x128xf32>
    %cst_24 = arith.constant dense<0.000000e+00> : vector<128x128xf32>
    %32 = tpu.matmul %28, %31, %cst_24 {dimension_numbers = #tpu.dot_dimension_numbers<[1], [0], [0], [1], [0, 0, 1, 1], [], []>} : vector<128x4xf32>, vector<4x128xf32>, vector<128x128xf32> -> vector<128x128xf32>
    %33 = arith.subf %16, %30 : vector<128x128xf32>
    %34 = arith.mulf %33, %32 : vector<128x128xf32>
    %c2 = arith.constant 2 : index
    %c0_25 = arith.constant 0 : index
    %35 = vector.load %arg6[%c2, %c0_25] : memref<4x128xf32, #tpu.memory_space<vmem>>, vector<1x128xf32>
    %36 = vector.broadcast %35 : vector<1x128xf32> to vector<128x128xf32>
    %37 = arith.mulf %34, %36 : vector<128x128xf32>
    %c3 = arith.constant 3 : index
    %c0_26 = arith.constant 0 : index
    %38 = vector.load %arg6[%c3, %c0_26] : memref<4x128xf32, #tpu.memory_space<vmem>>, vector<1x128xf32>
    %39 = vector.broadcast %38 : vector<1x128xf32> to vector<128x128xf32>
    %40 = arith.addf %37, %39 : vector<128x128xf32>
    %c0_27 = arith.constant 0 : index
    %c0_28 = arith.constant 0 : index
    %41 = vector.load %arg7[%c0_27, %c0_28] : memref<128x128xf32, #tpu.memory_space<vmem>>, vector<128x128xf32>
    tpu.vector_store %arg7[%c0_27, %c0_28], %40 {strides = array<i32>} : memref<128x128xf32, #tpu.memory_space<vmem>>, vector<128x128xf32>,
    return
  }
  func.func @transform_0(%arg0: i32) -> (i32, i32) {
    %c0_i32 = arith.constant 0 : i32
    %c0_i32_0 = arith.constant 0 : i32
    return %c0_i32, %arg0 : i32, i32
  }
  func.func @transform_1(%arg0: i32) -> (i32, i32) {
    %c0_i32 = arith.constant 0 : i32
    %c0_i32_0 = arith.constant 0 : i32
    %c0_i32_1 = arith.constant 0 : i32
    return %c0_i32, %c0_i32_0 : i32, i32
  }
  func.func @transform_2(%arg0: i32) -> (i32, i32) {
    %c0_i32 = arith.constant 0 : i32
    %c0_i32_0 = arith.constant 0 : i32
    %c0_i32_1 = arith.constant 0 : i32
    return %c0_i32, %c0_i32_0 : i32, i32
  }
  func.func @transform_3(%arg0: i32) -> (i32, i32) {
    %c0_i32 = arith.constant 0 : i32
    %c0_i32_0 = arith.constant 0 : i32
    %c0_i32_1 = arith.constant 0 : i32
    return %c0_i32, %c0_i32_0 : i32, i32
  }
  func.func @transform_4(%arg0: i32) -> (i32, i32) {
    %c0_i32 = arith.constant 0 : i32
    %c0_i32_0 = arith.constant 0 : i32
    %c0_i32_1 = arith.constant 0 : i32
    return %c0_i32, %c0_i32_0 : i32, i32
  }
  func.func @transform_5(%arg0: i32) -> (i32, i32) {
    %c0_i32 = arith.constant 0 : i32
    %c0_i32_0 = arith.constant 0 : i32
    %c0_i32_1 = arith.constant 0 : i32
    return %c0_i32, %c0_i32_0 : i32, i32
  }
  func.func @transform_6(%arg0: i32) -> (i32, i32) {
    %c0_i32 = arith.constant 0 : i32
    %c0_i32_0 = arith.constant 0 : i32
    return %arg0, %c0_i32 : i32, i32
  }
}

</mosaic_0001>

<llo_original>
// kernel: tile.36
$region0: #{tile.36}
  %s0 = inlined_call_operand.vmem [shape: f32[4,32], index: 0, kind: input, shape index: {}]
  %s1 = inlined_call_operand.vmem [shape: f32[1,128], index: 1, kind: output, shape index: {}]
  $region1: #{tile.36} parent=0
    #allocation0 [shape = 'u8[4096]{0}', space=vmem, size = 0x1000, scoped, tag = 'scoped mem for output reshape']
    #allocation1 [shape = 'u8[4096]{0}', space=vmem, size = 0x1000, scoped, tag = 'scoped mem for input reshape']
    %s3 = sshll.u32 1, 4
    %s4 = ssub.s32 %s3, 1
    %v5 = vld [vmem:[%s0] sm:%s4]
    %6 = vst [vmem:[#allocation1] sm:%s4] %v5
    %v7 = vld [vmem:[#allocation1] sm:$0x1]
    %vm8 = vcmask 261120
    %9 = vst.msk [vmem:[#allocation0] sm:$0x1] %vm8, %v7
    %s10 = scalar_lea.vmem [#allocation1], 3
    %v11 = vld [vmem:[%s10] sm:$0x1]
    %12 = vrot.lane.b32.xlu0 %v11, 96
    %v13 = vpop.permute.xlu0 %12
    %vm14 = vcmask 1048320
    %15 = vst.msk [vmem:[#allocation0] sm:$0x1] %vm14, %v13
    %s16 = scalar_lea.vmem [#allocation1], 2
    %v17 = vld [vmem:[%s16] sm:$0x1]
    %18 = vrot.lane.b32.xlu0 %v17, 64
    %v19 = vpop.permute.xlu0 %18
    %vm20 = vcmask 785920
    %21 = vst.msk [vmem:[#allocation0] sm:$0x1] %vm20, %v19
    %s22 = scalar_lea.vmem [#allocation1], 1
    %v23 = vld [vmem:[%s22] sm:$0x1]
    %24 = vrot.lane.b32.xlu0 %v23, 32
    %v25 = vpop.permute.xlu0 %24
    %vm26 = vcmask 523520
    %27 = vst.msk [vmem:[#allocation0] sm:$0x1] %vm26, %v25
    %s29 = sshll.u32 1, 1
    %s30 = ssub.s32 %s29, 1
    %v32 = vld [vmem:[#allocation0] sm:%s30]
    %s33 = sshll.u32 1, 1
    %s34 = ssub.s32 %s33, 1
    %35 = vst [vmem:[%s1] sm:%s34] %v32

// kernel: continuous_value_encoder.1
$region0: #{continuous_value_encoder.1}
  #allocation0 [shape = 'u32[]', space=smem, size = 0x4, offset = 0x4, fixed_abs, tag = 'smem constant byte address 0x4 - core index']
  #allocation1 [shape = 'u32[144,128]{1,0:T(1,128)}', space=vmem, size = 0x12000, scoped, tag = 'internal scratch']
  %s0 = inlined_call_operand.vmem [shape: f32[4,128], index: 0, kind: input, shape index: {}]
  %s1 = inlined_call_operand.vmem [shape: bf16[4,128], index: 1, kind: input, shape index: {}]
  %s2 = inlined_call_operand.vmem [shape: bf16[128,128], index: 2, kind: input, shape index: {}]
  %s3 = inlined_call_operand.vmem [shape: f32[128,4], index: 3, kind: input, shape index: {}]
  %s4 = inlined_call_operand.vmem [shape: f32[4,128], index: 4, kind: input, shape index: {}]
  %s5 = inlined_call_operand.vmem [shape: f32[4,128], index: 5, kind: input, shape index: {}]
  %s6 = inlined_call_operand.vmem [shape: f32[128,128], index: 6, kind: output, shape index: {}]
  %s7 = sld [smem:[#allocation0]]
  $region34: #{continuous_value_encoder.1} parent=0
    _
  %s9 = ssub.s32 1, %s7
  %s10 = scalar_select 0, %s9, %s7
  // Predicated region
  $region2: #{continuous_value_encoder.1} parent=0 // pred_check
    _
  $region3: #{continuous_value_encoder.1} parent=0 // pred_check_branch
    %12 = sbr.rel (0) target = $region5
  $region4: #{continuous_value_encoder.1} parent=0 // pred_region
    _
  $region5: #{continuous_value_encoder.1} parent=0 // pred_fallthru
    _
  // Predicated region
  $region6: #{continuous_value_encoder.1} parent=0 // pred_check
    _
  $region7: #{continuous_value_encoder.1} parent=0 // pred_check_branch
    %14 = sbr.rel (0) target = $region9
  $region8: #{continuous_value_encoder.1} parent=0 // pred_region
    _
  $region9: #{continuous_value_encoder.1} parent=0 // pred_fallthru
    _
  // Predicated region
  $region10: #{continuous_value_encoder.1} parent=0 // pred_check
    _
  $region11: #{continuous_value_encoder.1} parent=0 // pred_check_branch
    %16 = sbr.rel (0) target = $region13
  $region12: #{continuous_value_encoder.1} parent=0 // pred_region
    _
  $region13: #{continuous_value_encoder.1} parent=0 // pred_fallthru
    _
  // Predicated region
  $region14: #{continuous_value_encoder.1} parent=0 // pred_check
    _
  $region15: #{continuous_value_encoder.1} parent=0 // pred_check_branch
    %18 = sbr.rel (0) target = $region17
  $region16: #{continuous_value_encoder.1} parent=0 // pred_region
    _
  $region17: #{continuous_value_encoder.1} parent=0 // pred_fallthru
    _
  // Predicated region
  $region18: #{continuous_value_encoder.1} parent=0 // pred_check
    _
  $region19: #{continuous_value_encoder.1} parent=0 // pred_check_branch
    %20 = sbr.rel (0) target = $region21
  $region20: #{continuous_value_encoder.1} parent=0 // pred_region
    _
  $region21: #{continuous_value_encoder.1} parent=0 // pred_fallthru
    _
  // Predicated region
  $region22: #{continuous_value_encoder.1} parent=0 // pred_check
    _
  $region23: #{continuous_value_encoder.1} parent=0 // pred_check_branch
    %22 = sbr.rel (0) target = $region25
  $region24: #{continuous_value_encoder.1} parent=0 // pred_region
    _
  $region25: #{continuous_value_encoder.1} parent=0 // pred_fallthru
    _
  %v24 = vld [vmem:[%s0] sm:$0xf]
  %v25 = vmin.f32 %v24, 512.0
  %v26 = vpack.c.bf16 %v25, %v25
  %v27 = vld [vmem:[%s1] sm:$0x3]
  %v28 = vld [vmem:[%s5] sm:$0x1]
  %v29 = vlaneseq
  %v30 = vshrl.u32 %v29, 7
  %v31 = vsub.s32 0, %v30
  %v32 = vrot.slane %v28, %v31
  %33 = vxpose.xlu0.c.b16.start [1/8] %v26, 128
  %34 = vxpose.xlu0.c.b16.cont [2/8] 0, 128
  %35 = vxpose.xlu0.c.b16.cont [3/8] 0, 128
  %36 = vxpose.xlu0.c.b16.cont [4/8] 0, 128
  %37 = vxpose.xlu0.c.b16.cont [5/8] 0, 128
  %38 = vxpose.xlu0.c.b16.cont [6/8] 0, 128
  %39 = vxpose.xlu0.c.b16.cont [7/8] 0, 128
  %40 = vxpose.xlu0.c.b16.end [8/8] 0, 128
  %v41 = vpop.trf.xlu0
  %v42 = vpop.trf.xlu0
  %v43 = vpop.trf.xlu0
  %v44 = vpop.trf.xlu0
  %v45 = vpop.trf.xlu0
  %v46 = vpop.trf.xlu0
  %v47 = vpop.trf.xlu0
  %v48 = vpop.trf.xlu0
  %vm49 = vcmask 31744
  %v51 = vsel %vm49, %v41, 0
  %v54 = vsel %vm49, %v42, 0
  %v57 = vsel %vm49, %v43, 0
  %v60 = vsel %vm49, %v44, 0
  %v63 = vsel %vm49, %v45, 0
  %v66 = vsel %vm49, %v46, 0
  %v69 = vsel %vm49, %v47, 0
  %v72 = vsel %vm49, %v48, 0
  %vm74 = vcmask 1041408
  %v76 = vsel %vm74, %v27, 0
  %78 = vmatprep.subr.bf16.mxu0 0
  %79 = vmatpush1.bf16.msra.mxu0 0
  %80 = vmatprep.subr.bf16.mxu0 0
  %81 = vmatpush1.bf16.msra.mxu0 0
  %82 = vmatprep.subr.bf16.mxu0 0
  %83 = vmatpush1.bf16.msra.mxu0 0
  %84 = vmatprep.subr.bf16.mxu0 0
  %85 = vmatpush1.bf16.msra.mxu0 0
  %86 = vmatprep.subr.bf16.mxu0 0
  %87 = vmatpush1.bf16.msra.mxu0 0
  %88 = vmatprep.subr.bf16.mxu0 0
  %89 = vmatpush1.bf16.msra.mxu0 0
  %90 = vmatprep.subr.bf16.mxu0 0
  %91 = vmatpush1.bf16.msra.mxu0 0
  %92 = vmatprep.subr.bf16.mxu0 0
  %93 = vmatpush1.bf16.msra.mxu0 %v76
  %94 = vmatprep.subr.bf16.mxu0 0
  %95 = vmatpush2.bf16.msra.mxu0 0
  %96 = vmatprep.subr.bf16.mxu0 0
  %97 = vmatpush2.bf16.msra.mxu0 0
  %98 = vmatprep.subr.bf16.mxu0 0
  %99 = vmatpush2.bf16.msra.mxu0 0
  %100 = vmatprep.subr.bf16.mxu0 0
  %101 = vmatpush2.bf16.msra.mxu0 0
  %102 = vmatprep.subr.bf16.mxu0 0
  %103 = vmatpush2.bf16.msra.mxu0 0
  %104 = vmatprep.subr.bf16.mxu0 0
  %105 = vmatpush2.bf16.msra.mxu0 0
  %106 = vmatprep.subr.bf16.mxu0 0
  %107 = vmatpush2.bf16.msra.mxu0 0
  %108 = vmatprep.subr.bf16.mxu0 0
  %109 = vmatpush2.bf16.msra.mxu0 0
  %110 = vmatprep.mubr.bf16.mxu0 0
  %111 = vmatmul.mubr.bf16.gmra.mxu0 %v51
  %v112 = vpop.f32.mrf.mxu0
  %v113 = vadd.f32 %v32, %v112
  %v114 = vpop.f32.mrf.mxu0
  %v115 = vpop.f32.mrf.mxu0
  %v116 = vadd.f32 %v32, %v115
  %v117 = vpop.f32.mrf.mxu0
  %118 = vmatprep.mubr.bf16.mxu0 0
  %119 = vmatmul.mubr.bf16.gmra.mxu0 %v54
  %v120 = vpop.f32.mrf.mxu0
  %v121 = vadd.f32 %v32, %v120
  %v122 = vpop.f32.mrf.mxu0
  %v123 = vpop.f32.mrf.mxu0
  %v124 = vadd.f32 %v32, %v123
  %v125 = vpop.f32.mrf.mxu0
  %126 = vmatprep.mubr.bf16.mxu0 0
  %127 = vmatmul.mubr.bf16.gmra.mxu0 %v57
  %v128 = vpop.f32.mrf.mxu0
  %v129 = vadd.f32 %v32, %v128
  %v130 = vpop.f32.mrf.mxu0
  %v131 = vpop.f32.mrf.mxu0
  %v132 = vadd.f32 %v32, %v131
  %v133 = vpop.f32.mrf.mxu0
  %134 = vmatprep.mubr.bf16.mxu0 0
  %135 = vmatmul.mubr.bf16.gmra.mxu0 %v60
  %v136 = vpop.f32.mrf.mxu0
  %v137 = vadd.f32 %v32, %v136
  %v138 = vpop.f32.mrf.mxu0
  %v139 = vpop.f32.mrf.mxu0
  %v140 = vadd.f32 %v32, %v139
  %v141 = vpop.f32.mrf.mxu0
  %142 = vmatprep.mubr.bf16.mxu0 0
  %143 = vmatmul.mubr.bf16.gmra.mxu0 %v63
  %v144 = vpop.f32.mrf.mxu0
  %v145 = vadd.f32 %v32, %v144
  %v146 = vpop.f32.mrf.mxu0
  %v147 = vpop.f32.mrf.mxu0
  %v148 = vadd.f32 %v32, %v147
  %v149 = vpop.f32.mrf.mxu0
  %150 = vmatprep.mubr.bf16.mxu0 0
  %151 = vmatmul.mubr.bf16.gmra.mxu0 %v66
  %v152 = vpop.f32.mrf.mxu0
  %v153 = vadd.f32 %v32, %v152
  %v154 = vpop.f32.mrf.mxu0
  %v155 = vpop.f32.mrf.mxu0
  %v156 = vadd.f32 %v32, %v155
  %v157 = vpop.f32.mrf.mxu0
  %158 = vmatprep.mubr.bf16.mxu0 0
  %159 = vmatmul.mubr.bf16.gmra.mxu0 %v69
  %v160 = vpop.f32.mrf.mxu0
  %v161 = vadd.f32 %v32, %v160
  %v162 = vpop.f32.mrf.mxu0
  %v163 = vpop.f32.mrf.mxu0
  %v164 = vadd.f32 %v32, %v163
  %v165 = vpop.f32.mrf.mxu0
  %166 = vmatprep.mubr.bf16.mxu0 0
  %167 = vmatmul.mubr.bf16.gmra.mxu0 %v72
  %v168 = vpop.f32.mrf.mxu0
  %v169 = vadd.f32 %v32, %v168
  %v170 = vpop.f32.mrf.mxu0
  %v171 = vpop.f32.mrf.mxu0
  %v172 = vadd.f32 %v32, %v171
  %v173 = vpop.f32.mrf.mxu0
  %174 = vdwg.mxu0
  %v175 = vmax.f32 %v113, 0.0
  %v176 = vmax.f32 %v116, 0.0
  %v177 = vmax.f32 %v121, 0.0
  %v178 = vmax.f32 %v124, 0.0
  %v179 = vmax.f32 %v129, 0.0
  %v180 = vmax.f32 %v132, 0.0
  %v181 = vmax.f32 %v137, 0.0
  %v182 = vmax.f32 %v140, 0.0
  %v183 = vmax.f32 %v145, 0.0
  %v184 = vmax.f32 %v148, 0.0
  %v185 = vmax.f32 %v153, 0.0
  %v186 = vmax.f32 %v156, 0.0
  %v187 = vmax.f32 %v161, 0.0
  %v188 = vmax.f32 %v164, 0.0
  %v189 = vmax.f32 %v169, 0.0
  %v190 = vmax.f32 %v172, 0.0
  %v191 = vpack.c.bf16 %v176, %v175
  %v192 = vpack.c.bf16 %v178, %v177
  %v193 = vpack.c.bf16 %v180, %v179
  %v194 = vpack.c.bf16 %v182, %v181
  %v195 = vpack.c.bf16 %v184, %v183
  %v196 = vpack.c.bf16 %v186, %v185
  %v197 = vpack.c.bf16 %v188, %v187
  %v198 = vpack.c.bf16 %v190, %v189
  %v199 = vld [vmem:[%s2] sm:$0xf]
  %v200 = vld [vmem:[%s2 + $0x4] sm:$0xf]
  %v201 = vld [vmem:[%s2 + $0x8] sm:$0xf]
  %v202 = vld [vmem:[%s2 + $0xc] sm:$0xf]
  %v203 = vld [vmem:[%s2 + $0x10] sm:$0xf]
  %v204 = vld [vmem:[%s2 + $0x14] sm:$0xf]
  %v205 = vld [vmem:[%s2 + $0x18] sm:$0xf]
  %v206 = vld [vmem:[%s2 + $0x1c] sm:$0xf]
  %v207 = vld [vmem:[%s2 + $0x20] sm:$0xf]
  %v208 = vld [vmem:[%s2 + $0x24] sm:$0xf]
  %v209 = vld [vmem:[%s2 + $0x28] sm:$0xf]
  %v210 = vld [vmem:[%s2 + $0x2c] sm:$0xf]
  %v211 = vld [vmem:[%s2 + $0x30] sm:$0xf]
  %v212 = vld [vmem:[%s2 + $0x34] sm:$0xf]
  %v213 = vld [vmem:[%s2 + $0x38] sm:$0xf]
  %v214 = vld [vmem:[%s2 + $0x3c] sm:$0xf]
  %v215 = vld [vmem:[%s5 + $0x1] sm:$0x1]
  %v216 = vlaneseq
  %v217 = vshrl.u32 %v216, 7
  %v218 = vsub.s32 0, %v217
  %v219 = vrot.slane %v215, %v218
  %v236 = vunpack.c.l.b16 %v199
  %v237 = vunpack.c.l.b16 %v200
  %v238 = vunpack.c.l.b16 %v201
  %v239 = vunpack.c.l.b16 %v202
  %v240 = vunpack.c.l.b16 %v203
  %v241 = vunpack.c.l.b16 %v204
  %v242 = vunpack.c.l.b16 %v205
  %v243 = vunpack.c.l.b16 %v206
  %v244 = vunpack.c.l.b16 %v207
  %v245 = vunpack.c.l.b16 %v208
  %v246 = vunpack.c.l.b16 %v209
  %v247 = vunpack.c.l.b16 %v210
  %v248 = vunpack.c.l.b16 %v211
  %v249 = vunpack.c.l.b16 %v212
  %v250 = vunpack.c.l.b16 %v213
  %v251 = vunpack.c.l.b16 %v214
  %v252 = vpack.c.b16 %v237, %v236
  %v253 = vpack.c.b16 %v239, %v238
  %v254 = vpack.c.b16 %v241, %v240
  %v255 = vpack.c.b16 %v243, %v242
  %v256 = vpack.c.b16 %v245, %v244
  %v257 = vpack.c.b16 %v247, %v246
  %v258 = vpack.c.b16 %v249, %v248
  %v259 = vpack.c.b16 %v251, %v250
  %268 = vmatprep.subr.bf16.mxu0 0
  %269 = vmatpush1.bf16.msra.mxu0 %v259
  %270 = vmatprep.subr.bf16.mxu0 0
  %271 = vmatpush1.bf16.msra.mxu0 %v258
  %272 = vmatprep.subr.bf16.mxu0 0
  %273 = vmatpush1.bf16.msra.mxu0 %v257
  %274 = vmatprep.subr.bf16.mxu0 0
  %275 = vmatpush1.bf16.msra.mxu0 %v256
  %276 = vmatprep.subr.bf16.mxu0 0
  %277 = vmatpush1.bf16.msra.mxu0 %v255
  %278 = vmatprep.subr.bf16.mxu0 0
  %279 = vmatpush1.bf16.msra.mxu0 %v254
  %280 = vmatprep.subr.bf16.mxu0 0
  %281 = vmatpush1.bf16.msra.mxu0 %v253
  %282 = vmatprep.subr.bf16.mxu0 0
  %283 = vmatpush1.bf16.msra.mxu0 %v252
  %284 = vmatprep.subr.bf16.mxu0 0
  %285 = vmatpush2.bf16.msra.mxu0 0
  %286 = vmatprep.subr.bf16.mxu0 0
  %287 = vmatpush2.bf16.msra.mxu0 0
  %288 = vmatprep.subr.bf16.mxu0 0
  %289 = vmatpush2.bf16.msra.mxu0 0
  %290 = vmatprep.subr.bf16.mxu0 0
  %291 = vmatpush2.bf16.msra.mxu0 0
  %292 = vmatprep.subr.bf16.mxu0 0
  %293 = vmatpush2.bf16.msra.mxu0 0
  %294 = vmatprep.subr.bf16.mxu0 0
  %295 = vmatpush2.bf16.msra.mxu0 0
  %296 = vmatprep.subr.bf16.mxu0 0
  %297 = vmatpush2.bf16.msra.mxu0 0
  %298 = vmatprep.subr.bf16.mxu0 0
  %299 = vmatpush2.bf16.msra.mxu0 0
  %300 = vmatprep.mubr.bf16.mxu0 0
  %301 = vmatmul.mubr.bf16.gmra.mxu0 %v191
  %v302 = vpop.f32.mrf.mxu0
  %v303 = vadd.f32 %v219, %v302
  %v304 = vpop.f32.mrf.mxu0
  %v305 = vpop.f32.mrf.mxu0
  %v306 = vadd.f32 %v219, %v305
  %v307 = vpop.f32.mrf.mxu0
  %308 = vmatprep.mubr.bf16.mxu0 0
  %309 = vmatmul.mubr.bf16.gmra.mxu0 %v192
  %v310 = vpop.f32.mrf.mxu0
  %v311 = vadd.f32 %v219, %v310
  %v312 = vpop.f32.mrf.mxu0
  %v313 = vpop.f32.mrf.mxu0
  %v314 = vadd.f32 %v219, %v313
  %v315 = vpop.f32.mrf.mxu0
  %316 = vmatprep.mubr.bf16.mxu0 0
  %317 = vmatmul.mubr.bf16.gmra.mxu0 %v193
  %v318 = vpop.f32.mrf.mxu0
  %v319 = vadd.f32 %v219, %v318
  %v320 = vpop.f32.mrf.mxu0
  %v321 = vpop.f32.mrf.mxu0
  %v322 = vadd.f32 %v219, %v321
  %v323 = vpop.f32.mrf.mxu0
  %324 = vmatprep.mubr.bf16.mxu0 0
  %325 = vmatmul.mubr.bf16.gmra.mxu0 %v194
  %v326 = vpop.f32.mrf.mxu0
  %v327 = vadd.f32 %v219, %v326
  %v328 = vpop.f32.mrf.mxu0
  %v329 = vpop.f32.mrf.mxu0
  %v330 = vadd.f32 %v219, %v329
  %v331 = vpop.f32.mrf.mxu0
  %332 = vmatprep.mubr.bf16.mxu0 0
  %333 = vmatmul.mubr.bf16.gmra.mxu0 %v195
  %v334 = vpop.f32.mrf.mxu0
  %v335 = vadd.f32 %v219, %v334
  %v336 = vpop.f32.mrf.mxu0
  %v337 = vpop.f32.mrf.mxu0
  %v338 = vadd.f32 %v219, %v337
  %v339 = vpop.f32.mrf.mxu0
  %340 = vmatprep.mubr.bf16.mxu0 0
  %341 = vmatmul.mubr.bf16.gmra.mxu0 %v196
  %v342 = vpop.f32.mrf.mxu0
  %v343 = vadd.f32 %v219, %v342
  %v344 = vpop.f32.mrf.mxu0
  %v345 = vpop.f32.mrf.mxu0
  %v346 = vadd.f32 %v219, %v345
  %v347 = vpop.f32.mrf.mxu0
  %348 = vmatprep.mubr.bf16.mxu0 0
  %349 = vmatmul.mubr.bf16.gmra.mxu0 %v197
  %v350 = vpop.f32.mrf.mxu0
  %v351 = vadd.f32 %v219, %v350
  %v352 = vpop.f32.mrf.mxu0
  %v353 = vpop.f32.mrf.mxu0
  %v354 = vadd.f32 %v219, %v353
  %v355 = vpop.f32.mrf.mxu0
  %356 = vmatprep.mubr.bf16.mxu0 0
  %357 = vmatmul.mubr.bf16.gmra.mxu0 %v198
  %v358 = vpop.f32.mrf.mxu0
  %v359 = vadd.f32 %v219, %v358
  %v360 = vpop.f32.mrf.mxu0
  %v361 = vpop.f32.mrf.mxu0
  %v362 = vadd.f32 %v219, %v361
  %v363 = vpop.f32.mrf.mxu0
  %364 = vdwg.mxu0
  %v365 = vld [vmem:[%s3] sm:$0xff]
  %v366 = vld [vmem:[%s3 + $0x8] sm:$0xff]
  %v367 = vld [vmem:[%s3 + $0x10] sm:$0xff]
  %v368 = vld [vmem:[%s3 + $0x18] sm:$0xff]
  %v369 = vld [vmem:[%s3 + $0x20] sm:$0xff]
  %v370 = vld [vmem:[%s3 + $0x28] sm:$0xff]
  %v371 = vld [vmem:[%s3 + $0x30] sm:$0xff]
  %v372 = vld [vmem:[%s3 + $0x38] sm:$0xff]
  %v373 = vld [vmem:[%s3 + $0x40] sm:$0xff]
  %v374 = vld [vmem:[%s3 + $0x48] sm:$0xff]
  %v375 = vld [vmem:[%s3 + $0x50] sm:$0xff]
  %v376 = vld [vmem:[%s3 + $0x58] sm:$0xff]
  %v377 = vld [vmem:[%s3 + $0x60] sm:$0xff]
  %v378 = vld [vmem:[%s3 + $0x68] sm:$0xff]
  %v379 = vld [vmem:[%s3 + $0x70] sm:$0xff]
  %v380 = vld [vmem:[%s3 + $0x78] sm:$0xff]
  %381 = vmatprep.subr.mxu0 0.0
  %382 = vmatpush1.msra.mxu0 %v380
  %383 = vmatprep.subr.mxu0 0.0
  %384 = vmatpush1.msra.mxu0 %v379
  %385 = vmatprep.subr.mxu0 0.0
  %386 = vmatpush1.msra.mxu0 %v378
  %387 = vmatprep.subr.mxu0 0.0
  %388 = vmatpush1.msra.mxu0 %v377
  %389 = vmatprep.subr.mxu0 0.0
  %390 = vmatpush1.msra.mxu0 %v376
  %391 = vmatprep.subr.mxu0 0.0
  %392 = vmatpush1.msra.mxu0 %v375
  %393 = vmatprep.subr.mxu0 0.0
  %394 = vmatpush1.msra.mxu0 %v374
  %395 = vmatprep.subr.mxu0 0.0
  %396 = vmatpush1.msra.mxu0 %v373
  %397 = vmatprep.subr.mxu0 0.0
  %398 = vmatpush1.msra.mxu0 %v372
  %399 = vmatprep.subr.mxu0 0.0
  %400 = vmatpush1.msra.mxu0 %v371
  %401 = vmatprep.subr.mxu0 0.0
  %402 = vmatpush1.msra.mxu0 %v370
  %403 = vmatprep.subr.mxu0 0.0
  %404 = vmatpush1.msra.mxu0 %v369
  %405 = vmatprep.subr.mxu0 0.0
  %406 = vmatpush1.msra.mxu0 %v368
  %407 = vmatprep.subr.mxu0 0.0
  %408 = vmatpush1.msra.mxu0 %v367
  %409 = vmatprep.subr.mxu0 0.0
  %410 = vmatpush1.msra.mxu0 %v366
  %411 = vmatprep.subr.mxu0 0.0
  %412 = vmatpush1.msra.mxu0 %v365
  %413 = vmatprep.subr.mxu0 0.0
  %414 = vmatpush2.msra.mxu0 0.0
  %415 = vmatprep.subr.mxu0 0.0
  %416 = vmatpush2.msra.mxu0 0.0
  %417 = vmatprep.subr.mxu0 0.0
  %418 = vmatpush2.msra.mxu0 0.0
  %419 = vmatprep.subr.mxu0 0.0
  %420 = vmatpush2.msra.mxu0 0.0
  %421 = vmatprep.subr.mxu0 0.0
  %422 = vmatpush2.msra.mxu0 0.0
  %423 = vmatprep.subr.mxu0 0.0
  %424 = vmatpush2.msra.mxu0 0.0
  %425 = vmatprep.subr.mxu0 0.0
  %426 = vmatpush2.msra.mxu0 0.0
  %427 = vmatprep.subr.mxu0 0.0
  %428 = vmatpush2.msra.mxu0 0.0
  %429 = vmatprep.subr.mxu0 0.0
  %430 = vmatpush2.msra.mxu0 0.0
  %431 = vmatprep.subr.mxu0 0.0
  %432 = vmatpush2.msra.mxu0 0.0
  %433 = vmatprep.subr.mxu0 0.0
  %434 = vmatpush2.msra.mxu0 0.0
  %435 = vmatprep.subr.mxu0 0.0
  %436 = vmatpush2.msra.mxu0 0.0
  %437 = vmatprep.subr.mxu0 0.0
  %438 = vmatpush2.msra.mxu0 0.0
  %439 = vmatprep.subr.mxu0 0.0
  %440 = vmatpush2.msra.mxu0 0.0
  %441 = vmatprep.subr.mxu0 0.0
  %442 = vmatpush2.msra.mxu0 0.0
  %443 = vmatprep.subr.mxu0 0.0
  %444 = vmatpush2.msra.mxu0 0.0
  %445 = vmatprep.mubr.f32.mxu0 0.0
  %446 = vmatmul.mubr.f32.gmra.mxu0 %v303
  %v447 = vpop.f32.mrf.mxu0
  %v448 = vadd.f32 0.0, %v447
  %v449 = vpop.f32.mrf.mxu0
  %450 = vmatprep.mubr.f32.mxu0 0.0
  %451 = vmatmul.mubr.f32.gmra.mxu0 %v306
  %v452 = vpop.f32.mrf.mxu0
  %v453 = vadd.f32 0.0, %v452
  %v454 = vpop.f32.mrf.mxu0
  %455 = vmatprep.mubr.f32.mxu0 0.0
  %456 = vmatmul.mubr.f32.gmra.mxu0 %v311
  %v457 = vpop.f32.mrf.mxu0
  %v458 = vadd.f32 0.0, %v457
  %v459 = vpop.f32.mrf.mxu0
  %460 = vmatprep.mubr.f32.mxu0 0.0
  %461 = vmatmul.mubr.f32.gmra.mxu0 %v314
  %v462 = vpop.f32.mrf.mxu0
  %v463 = vadd.f32 0.0, %v462
  %v464 = vpop.f32.mrf.mxu0
  %465 = vmatprep.mubr.f32.mxu0 0.0
  %466 = vmatmul.mubr.f32.gmra.mxu0 %v319
  %v467 = vpop.f32.mrf.mxu0
  %v468 = vadd.f32 0.0, %v467
  %v469 = vpop.f32.mrf.mxu0
  %470 = vmatprep.mubr.f32.mxu0 0.0
  %471 = vmatmul.mubr.f32.gmra.mxu0 %v322
  %v472 = vpop.f32.mrf.mxu0
  %v473 = vadd.f32 0.0, %v472
  %v474 = vpop.f32.mrf.mxu0
  %475 = vmatprep.mubr.f32.mxu0 0.0
  %476 = vmatmul.mubr.f32.gmra.mxu0 %v327
  %v477 = vpop.f32.mrf.mxu0
  %v478 = vadd.f32 0.0, %v477
  %v479 = vpop.f32.mrf.mxu0
  %480 = vmatprep.mubr.f32.mxu0 0.0
  %481 = vmatmul.mubr.f32.gmra.mxu0 %v330
  %v482 = vpop.f32.mrf.mxu0
  %v483 = vadd.f32 0.0, %v482
  %v484 = vpop.f32.mrf.mxu0
  %485 = vmatprep.mubr.f32.mxu0 0.0
  %486 = vmatmul.mubr.f32.gmra.mxu0 %v335
  %v487 = vpop.f32.mrf.mxu0
  %v488 = vadd.f32 0.0, %v487
  %v489 = vpop.f32.mrf.mxu0
  %490 = vmatprep.mubr.f32.mxu0 0.0
  %491 = vmatmul.mubr.f32.gmra.mxu0 %v338
  %v492 = vpop.f32.mrf.mxu0
  %v493 = vadd.f32 0.0, %v492
  %v494 = vpop.f32.mrf.mxu0
  %495 = vmatprep.mubr.f32.mxu0 0.0
  %496 = vmatmul.mubr.f32.gmra.mxu0 %v343
  %v497 = vpop.f32.mrf.mxu0
  %v498 = vadd.f32 0.0, %v497
  %v499 = vpop.f32.mrf.mxu0
  %500 = vmatprep.mubr.f32.mxu0 0.0
  %501 = vmatmul.mubr.f32.gmra.mxu0 %v346
  %v502 = vpop.f32.mrf.mxu0
  %v503 = vadd.f32 0.0, %v502
  %v504 = vpop.f32.mrf.mxu0
  %505 = vmatprep.mubr.f32.mxu0 0.0
  %506 = vmatmul.mubr.f32.gmra.mxu0 %v351
  %v507 = vpop.f32.mrf.mxu0
  %v508 = vadd.f32 0.0, %v507
  %v509 = vpop.f32.mrf.mxu0
  %510 = vmatprep.mubr.f32.mxu0 0.0
  %511 = vmatmul.mubr.f32.gmra.mxu0 %v354
  %v512 = vpop.f32.mrf.mxu0
  %v513 = vadd.f32 0.0, %v512
  %v514 = vpop.f32.mrf.mxu0
  %515 = vmatprep.mubr.f32.mxu0 0.0
  %516 = vmatmul.mubr.f32.gmra.mxu0 %v359
  %v517 = vpop.f32.mrf.mxu0
  %v518 = vadd.f32 0.0, %v517
  %v519 = vpop.f32.mrf.mxu0
  %520 = vmatprep.mubr.f32.mxu0 0.0
  %521 = vmatmul.mubr.f32.gmra.mxu0 %v362
  %v522 = vpop.f32.mrf.mxu0
  %v523 = vadd.f32 0.0, %v522
  %v524 = vpop.f32.mrf.mxu0
  %525 = vdwg.mxu0
  %v526 = vmul.f32 %v303, %v303
  %v527 = vmul.f32 %v306, %v306
  %v528 = vmul.f32 %v311, %v311
  %v529 = vmul.f32 %v314, %v314
  %v530 = vmul.f32 %v319, %v319
  %v531 = vmul.f32 %v322, %v322
  %v532 = vmul.f32 %v327, %v327
  %v533 = vmul.f32 %v330, %v330
  %v534 = vmul.f32 %v335, %v335
  %v535 = vmul.f32 %v338, %v338
  %v536 = vmul.f32 %v343, %v343
  %v537 = vmul.f32 %v346, %v346
  %v538 = vmul.f32 %v351, %v351
  %v539 = vmul.f32 %v354, %v354
  %v540 = vmul.f32 %v359, %v359
  %v541 = vmul.f32 %v362, %v362
  %542 = vmatprep.subr.mxu0 0.0
  %543 = vmatpush1.msra.mxu0 %v380
  %544 = vmatprep.subr.mxu0 0.0
  %545 = vmatpush1.msra.mxu0 %v379
  %546 = vmatprep.subr.mxu0 0.0
  %547 = vmatpush1.msra.mxu0 %v378
  %548 = vmatprep.subr.mxu0 0.0
  %549 = vmatpush1.msra.mxu0 %v377
  %550 = vmatprep.subr.mxu0 0.0
  %551 = vmatpush1.msra.mxu0 %v376
  %552 = vmatprep.subr.mxu0 0.0
  %553 = vmatpush1.msra.mxu0 %v375
  %554 = vmatprep.subr.mxu0 0.0
  %555 = vmatpush1.msra.mxu0 %v374
  %556 = vmatprep.subr.mxu0 0.0
  %557 = vmatpush1.msra.mxu0 %v373
  %558 = vmatprep.subr.mxu0 0.0
  %559 = vmatpush1.msra.mxu0 %v372
  %560 = vmatprep.subr.mxu0 0.0
  %561 = vmatpush1.msra.mxu0 %v371
  %562 = vmatprep.subr.mxu0 0.0
  %563 = vmatpush1.msra.mxu0 %v370
  %564 = vmatprep.subr.mxu0 0.0
  %565 = vmatpush1.msra.mxu0 %v369
  %566 = vmatprep.subr.mxu0 0.0
  %567 = vmatpush1.msra.mxu0 %v368
  %568 = vmatprep.subr.mxu0 0.0
  %569 = vmatpush1.msra.mxu0 %v367
  %570 = vmatprep.subr.mxu0 0.0
  %571 = vmatpush1.msra.mxu0 %v366
  %572 = vmatprep.subr.mxu0 0.0
  %573 = vmatpush1.msra.mxu0 %v365
  %574 = vmatprep.subr.mxu0 0.0
  %575 = vmatpush2.msra.mxu0 0.0
  %576 = vmatprep.subr.mxu0 0.0
  %577 = vmatpush2.msra.mxu0 0.0
  %578 = vmatprep.subr.mxu0 0.0
  %579 = vmatpush2.msra.mxu0 0.0
  %580 = vmatprep.subr.mxu0 0.0
  %581 = vmatpush2.msra.mxu0 0.0
  %582 = vmatprep.subr.mxu0 0.0
  %583 = vmatpush2.msra.mxu0 0.0
  %584 = vmatprep.subr.mxu0 0.0
  %585 = vmatpush2.msra.mxu0 0.0
  %586 = vmatprep.subr.mxu0 0.0
  %587 = vmatpush2.msra.mxu0 0.0
  %588 = vmatprep.subr.mxu0 0.0
  %589 = vmatpush2.msra.mxu0 0.0
  %590 = vmatprep.subr.mxu0 0.0
  %591 = vmatpush2.msra.mxu0 0.0
  %592 = vmatprep.subr.mxu0 0.0
  %593 = vmatpush2.msra.mxu0 0.0
  %594 = vmatprep.subr.mxu0 0.0
  %595 = vmatpush2.msra.mxu0 0.0
  %596 = vmatprep.subr.mxu0 0.0
  %597 = vmatpush2.msra.mxu0 0.0
  %598 = vmatprep.subr.mxu0 0.0
  %599 = vmatpush2.msra.mxu0 0.0
  %600 = vmatprep.subr.mxu0 0.0
  %601 = vmatpush2.msra.mxu0 0.0
  %602 = vmatprep.subr.mxu0 0.0
  %603 = vmatpush2.msra.mxu0 0.0
  %604 = vmatprep.subr.mxu0 0.0
  %605 = vmatpush2.msra.mxu0 0.0
  %606 = vmatprep.mubr.f32.mxu0 0.0
  %607 = vmatmul.mubr.f32.gmra.mxu0 %v526
  %v608 = vpop.f32.mrf.mxu0
  %v609 = vadd.f32 0.0, %v608
  %v610 = vpop.f32.mrf.mxu0
  %611 = vmatprep.mubr.f32.mxu0 0.0
  %612 = vmatmul.mubr.f32.gmra.mxu0 %v527
  %v613 = vpop.f32.mrf.mxu0
  %v614 = vadd.f32 0.0, %v613
  %v615 = vpop.f32.mrf.mxu0
  %616 = vmatprep.mubr.f32.mxu0 0.0
  %617 = vmatmul.mubr.f32.gmra.mxu0 %v528
  %v618 = vpop.f32.mrf.mxu0
  %v619 = vadd.f32 0.0, %v618
  %v620 = vpop.f32.mrf.mxu0
  %621 = vmatprep.mubr.f32.mxu0 0.0
  %622 = vmatmul.mubr.f32.gmra.mxu0 %v529
  %v623 = vpop.f32.mrf.mxu0
  %v624 = vadd.f32 0.0, %v623
  %v625 = vpop.f32.mrf.mxu0
  %626 = vmatprep.mubr.f32.mxu0 0.0
  %627 = vmatmul.mubr.f32.gmra.mxu0 %v530
  %v628 = vpop.f32.mrf.mxu0
  %v629 = vadd.f32 0.0, %v628
  %v630 = vpop.f32.mrf.mxu0
  %631 = vmatprep.mubr.f32.mxu0 0.0
  %632 = vmatmul.mubr.f32.gmra.mxu0 %v531
  %v633 = vpop.f32.mrf.mxu0
  %v634 = vadd.f32 0.0, %v633
  %v635 = vpop.f32.mrf.mxu0
  %636 = vmatprep.mubr.f32.mxu0 0.0
  %637 = vmatmul.mubr.f32.gmra.mxu0 %v532
  %v638 = vpop.f32.mrf.mxu0
  %v639 = vadd.f32 0.0, %v638
  %v640 = vpop.f32.mrf.mxu0
  %641 = vmatprep.mubr.f32.mxu0 0.0
  %642 = vmatmul.mubr.f32.gmra.mxu0 %v533
  %v643 = vpop.f32.mrf.mxu0
  %v644 = vadd.f32 0.0, %v643
  %v645 = vpop.f32.mrf.mxu0
  %646 = vmatprep.mubr.f32.mxu0 0.0
  %647 = vmatmul.mubr.f32.gmra.mxu0 %v534
  %v648 = vpop.f32.mrf.mxu0
  %v649 = vadd.f32 0.0, %v648
  %v650 = vpop.f32.mrf.mxu0
  %651 = vmatprep.mubr.f32.mxu0 0.0
  %652 = vmatmul.mubr.f32.gmra.mxu0 %v535
  %v653 = vpop.f32.mrf.mxu0
  %v654 = vadd.f32 0.0, %v653
  %v655 = vpop.f32.mrf.mxu0
  %656 = vmatprep.mubr.f32.mxu0 0.0
  %657 = vmatmul.mubr.f32.gmra.mxu0 %v536
  %v658 = vpop.f32.mrf.mxu0
  %v659 = vadd.f32 0.0, %v658
  %v660 = vpop.f32.mrf.mxu0
  %661 = vmatprep.mubr.f32.mxu0 0.0
  %662 = vmatmul.mubr.f32.gmra.mxu0 %v537
  %v663 = vpop.f32.mrf.mxu0
  %v664 = vadd.f32 0.0, %v663
  %v665 = vpop.f32.mrf.mxu0
  %666 = vmatprep.mubr.f32.mxu0 0.0
  %667 = vmatmul.mubr.f32.gmra.mxu0 %v538
  %v668 = vpop.f32.mrf.mxu0
  %v669 = vadd.f32 0.0, %v668
  %v670 = vpop.f32.mrf.mxu0
  %671 = vmatprep.mubr.f32.mxu0 0.0
  %672 = vmatmul.mubr.f32.gmra.mxu0 %v539
  %v673 = vpop.f32.mrf.mxu0
  %v674 = vadd.f32 0.0, %v673
  %v675 = vpop.f32.mrf.mxu0
  %676 = vmatprep.mubr.f32.mxu0 0.0
  %677 = vmatmul.mubr.f32.gmra.mxu0 %v540
  %v678 = vpop.f32.mrf.mxu0
  %v679 = vadd.f32 0.0, %v678
  %v680 = vpop.f32.mrf.mxu0
  %681 = vmatprep.mubr.f32.mxu0 0.0
  %682 = vmatmul.mubr.f32.gmra.mxu0 %v541
  %v683 = vpop.f32.mrf.mxu0
  %v684 = vadd.f32 0.0, %v683
  %v685 = vpop.f32.mrf.mxu0
  %686 = vdwg.mxu0
  %v687 = vmul.f32 %v448, %v448
  %v688 = vmul.f32 %v453, %v453
  %v689 = vmul.f32 %v458, %v458
  %v690 = vmul.f32 %v463, %v463
  %v691 = vmul.f32 %v468, %v468
  %v692 = vmul.f32 %v473, %v473
  %v693 = vmul.f32 %v478, %v478
  %v694 = vmul.f32 %v483, %v483
  %v695 = vmul.f32 %v488, %v488
  %v696 = vmul.f32 %v493, %v493
  %v697 = vmul.f32 %v498, %v498
  %v698 = vmul.f32 %v503, %v503
  %v699 = vmul.f32 %v508, %v508
  %v700 = vmul.f32 %v513, %v513
  %v701 = vmul.f32 %v518, %v518
  %v702 = vmul.f32 %v523, %v523
  %v703 = vsub.f32 %v609, %v687
  %v704 = vsub.f32 %v614, %v688
  %v705 = vsub.f32 %v619, %v689
  %v706 = vsub.f32 %v624, %v690
  %v707 = vsub.f32 %v629, %v691
  %v708 = vsub.f32 %v634, %v692
  %v709 = vsub.f32 %v639, %v693
  %v710 = vsub.f32 %v644, %v694
  %v711 = vsub.f32 %v649, %v695
  %v712 = vsub.f32 %v654, %v696
  %v713 = vsub.f32 %v659, %v697
  %v714 = vsub.f32 %v664, %v698
  %v715 = vsub.f32 %v669, %v699
  %v716 = vsub.f32 %v674, %v700
  %v717 = vsub.f32 %v679, %v701
  %v718 = vsub.f32 %v684, %v702
  %v719 = vmax.f32 %v703, 0.0
  %v720 = vmax.f32 %v704, 0.0
  %v721 = vmax.f32 %v705, 0.0
  %v722 = vmax.f32 %v706, 0.0
  %v723 = vmax.f32 %v707, 0.0
  %v724 = vmax.f32 %v708, 0.0
  %v725 = vmax.f32 %v709, 0.0
  %v726 = vmax.f32 %v710, 0.0
  %v727 = vmax.f32 %v711, 0.0
  %v728 = vmax.f32 %v712, 0.0
  %v729 = vmax.f32 %v713, 0.0
  %v730 = vmax.f32 %v714, 0.0
  %v731 = vmax.f32 %v715, 0.0
  %v732 = vmax.f32 %v716, 0.0
  %v733 = vmax.f32 %v717, 0.0
  %v734 = vmax.f32 %v718, 0.0
  %v735 = vadd.f32 %v719, 1e-05
  %v736 = vadd.f32 %v720, 1e-05
  %v737 = vadd.f32 %v721, 1e-05
  %v738 = vadd.f32 %v722, 1e-05
  %v739 = vadd.f32 %v723, 1e-05
  %v740 = vadd.f32 %v724, 1e-05
  %v741 = vadd.f32 %v725, 1e-05
  %v742 = vadd.f32 %v726, 1e-05
  %v743 = vadd.f32 %v727, 1e-05
  %v744 = vadd.f32 %v728, 1e-05
  %v745 = vadd.f32 %v729, 1e-05
  %v746 = vadd.f32 %v730, 1e-05
  %v747 = vadd.f32 %v731, 1e-05
  %v748 = vadd.f32 %v732, 1e-05
  %v749 = vadd.f32 %v733, 1e-05
  %v750 = vadd.f32 %v734, 1e-05
  %v751 = vrsqrt.pop %v735
  %v752 = vrsqrt.pop %v736
  %v753 = vrsqrt.pop %v737
  %v754 = vrsqrt.pop %v738
  %v755 = vrsqrt.pop %v739
  %v756 = vrsqrt.pop %v740
  %v757 = vrsqrt.pop %v741
  %v758 = vrsqrt.pop %v742
  %v759 = vrsqrt.pop %v743
  %v760 = vrsqrt.pop %v744
  %v761 = vrsqrt.pop %v745
  %v762 = vrsqrt.pop %v746
  %v763 = vrsqrt.pop %v747
  %v764 = vrsqrt.pop %v748
  %v765 = vrsqrt.pop %v749
  %v766 = vrsqrt.pop %v750
  %v767 = vld [vmem:[%s4] sm:$0xf]
  %v769 = vsel %vm49, %v448, 0
  %v772 = vsel %vm49, %v453, 0
  %v775 = vsel %vm49, %v458, 0
  %v778 = vsel %vm49, %v463, 0
  %v781 = vsel %vm49, %v468, 0
  %v784 = vsel %vm49, %v473, 0
  %v787 = vsel %vm49, %v478, 0
  %v790 = vsel %vm49, %v483, 0
  %v793 = vsel %vm49, %v488, 0
  %v796 = vsel %vm49, %v493, 0
  %v799 = vsel %vm49, %v498, 0
  %v802 = vsel %vm49, %v503, 0
  %v805 = vsel %vm49, %v508, 0
  %v808 = vsel %vm49, %v513, 0
  %v811 = vsel %vm49, %v518, 0
  %v814 = vsel %vm49, %v523, 0
  %vm816 = vcmask 1043456
  %v818 = vsel %vm816, %v767, 0
  %820 = vmatprep.subr.mxu0 0.0
  %821 = vmatpush1.msra.mxu0 0.0
  %822 = vmatprep.subr.mxu0 0.0
  %823 = vmatpush1.msra.mxu0 0.0
  %824 = vmatprep.subr.mxu0 0.0
  %825 = vmatpush1.msra.mxu0 0.0
  %826 = vmatprep.subr.mxu0 0.0
  %827 = vmatpush1.msra.mxu0 0.0
  %828 = vmatprep.subr.mxu0 0.0
  %829 = vmatpush1.msra.mxu0 0.0
  %830 = vmatprep.subr.mxu0 0.0
  %831 = vmatpush1.msra.mxu0 0.0
  %832 = vmatprep.subr.mxu0 0.0
  %833 = vmatpush1.msra.mxu0 0.0
  %834 = vmatprep.subr.mxu0 0.0
  %835 = vmatpush1.msra.mxu0 0.0
  %836 = vmatprep.subr.mxu0 0.0
  %837 = vmatpush1.msra.mxu0 0.0
  %838 = vmatprep.subr.mxu0 0.0
  %839 = vmatpush1.msra.mxu0 0.0
  %840 = vmatprep.subr.mxu0 0.0
  %841 = vmatpush1.msra.mxu0 0.0
  %842 = vmatprep.subr.mxu0 0.0
  %843 = vmatpush1.msra.mxu0 0.0
  %844 = vmatprep.subr.mxu0 0.0
  %845 = vmatpush1.msra.mxu0 0.0
  %846 = vmatprep.subr.mxu0 0.0
  %847 = vmatpush1.msra.mxu0 0.0
  %848 = vmatprep.subr.mxu0 0.0
  %849 = vmatpush1.msra.mxu0 0.0
  %850 = vmatprep.subr.mxu0 0.0
  %851 = vmatpush1.msra.mxu0 %v818
  %852 = vmatprep.subr.mxu0 0.0
  %853 = vmatpush2.msra.mxu0 0.0
  %854 = vmatprep.subr.mxu0 0.0
  %855 = vmatpush2.msra.mxu0 0.0
  %856 = vmatprep.subr.mxu0 0.0
  %857 = vmatpush2.msra.mxu0 0.0
  %858 = vmatprep.subr.mxu0 0.0
  %859 = vmatpush2.msra.mxu0 0.0
  %860 = vmatprep.subr.mxu0 0.0
  %861 = vmatpush2.msra.mxu0 0.0
  %862 = vmatprep.subr.mxu0 0.0
  %863 = vmatpush2.msra.mxu0 0.0
  %864 = vmatprep.subr.mxu0 0.0
  %865 = vmatpush2.msra.mxu0 0.0
  %866 = vmatprep.subr.mxu0 0.0
  %867 = vmatpush2.msra.mxu0 0.0
  %868 = vmatprep.subr.mxu0 0.0
  %869 = vmatpush2.msra.mxu0 0.0
  %870 = vmatprep.subr.mxu0 0.0
  %871 = vmatpush2.msra.mxu0 0.0
  %872 = vmatprep.subr.mxu0 0.0
  %873 = vmatpush2.msra.mxu0 0.0
  %874 = vmatprep.subr.mxu0 0.0
  %875 = vmatpush2.msra.mxu0 0.0
  %876 = vmatprep.subr.mxu0 0.0
  %877 = vmatpush2.msra.mxu0 0.0
  %878 = vmatprep.subr.mxu0 0.0
  %879 = vmatpush2.msra.mxu0 0.0
  %880 = vmatprep.subr.mxu0 0.0
  %881 = vmatpush2.msra.mxu0 0.0
  %882 = vmatprep.subr.mxu0 0.0
  %883 = vmatpush2.msra.mxu0 0.0
  %884 = vmatprep.mubr.f32.mxu0 0.0
  %885 = vmatmul.mubr.f32.gmra.mxu0 %v769
  %v886 = vpop.f32.mrf.mxu0
  %v887 = vadd.f32 0.0, %v886
  %v888 = vpop.f32.mrf.mxu0
  %889 = vmatprep.mubr.f32.mxu0 0.0
  %890 = vmatmul.mubr.f32.gmra.mxu0 %v772
  %v891 = vpop.f32.mrf.mxu0
  %v892 = vadd.f32 0.0, %v891
  %v893 = vpop.f32.mrf.mxu0
  %894 = vmatprep.mubr.f32.mxu0 0.0
  %895 = vmatmul.mubr.f32.gmra.mxu0 %v775
  %v896 = vpop.f32.mrf.mxu0
  %v897 = vadd.f32 0.0, %v896
  %v898 = vpop.f32.mrf.mxu0
  %899 = vmatprep.mubr.f32.mxu0 0.0
  %900 = vmatmul.mubr.f32.gmra.mxu0 %v778
  %v901 = vpop.f32.mrf.mxu0
  %v902 = vadd.f32 0.0, %v901
  %v903 = vpop.f32.mrf.mxu0
  %904 = vmatprep.mubr.f32.mxu0 0.0
  %905 = vmatmul.mubr.f32.gmra.mxu0 %v781
  %v906 = vpop.f32.mrf.mxu0
  %v907 = vadd.f32 0.0, %v906
  %v908 = vpop.f32.mrf.mxu0
  %909 = vmatprep.mubr.f32.mxu0 0.0
  %910 = vmatmul.mubr.f32.gmra.mxu0 %v784
  %v911 = vpop.f32.mrf.mxu0
  %v912 = vadd.f32 0.0, %v911
  %v913 = vpop.f32.mrf.mxu0
  %914 = vmatprep.mubr.f32.mxu0 0.0
  %915 = vmatmul.mubr.f32.gmra.mxu0 %v787
  %v916 = vpop.f32.mrf.mxu0
  %v917 = vadd.f32 0.0, %v916
  %v918 = vpop.f32.mrf.mxu0
  %919 = vmatprep.mubr.f32.mxu0 0.0
  %920 = vmatmul.mubr.f32.gmra.mxu0 %v790
  %v921 = vpop.f32.mrf.mxu0
  %v922 = vadd.f32 0.0, %v921
  %v923 = vpop.f32.mrf.mxu0
  %924 = vmatprep.mubr.f32.mxu0 0.0
  %925 = vmatmul.mubr.f32.gmra.mxu0 %v793
  %v926 = vpop.f32.mrf.mxu0
  %v927 = vadd.f32 0.0, %v926
  %v928 = vpop.f32.mrf.mxu0
  %929 = vmatprep.mubr.f32.mxu0 0.0
  %930 = vmatmul.mubr.f32.gmra.mxu0 %v796
  %v931 = vpop.f32.mrf.mxu0
  %v932 = vadd.f32 0.0, %v931
  %v933 = vpop.f32.mrf.mxu0
  %934 = vmatprep.mubr.f32.mxu0 0.0
  %935 = vmatmul.mubr.f32.gmra.mxu0 %v799
  %v936 = vpop.f32.mrf.mxu0
  %v937 = vadd.f32 0.0, %v936
  %v938 = vpop.f32.mrf.mxu0
  %939 = vmatprep.mubr.f32.mxu0 0.0
  %940 = vmatmul.mubr.f32.gmra.mxu0 %v802
  %v941 = vpop.f32.mrf.mxu0
  %v942 = vadd.f32 0.0, %v941
  %v943 = vpop.f32.mrf.mxu0
  %944 = vmatprep.mubr.f32.mxu0 0.0
  %945 = vmatmul.mubr.f32.gmra.mxu0 %v805
  %v946 = vpop.f32.mrf.mxu0
  %v947 = vadd.f32 0.0, %v946
  %v948 = vpop.f32.mrf.mxu0
  %949 = vmatprep.mubr.f32.mxu0 0.0
  %950 = vmatmul.mubr.f32.gmra.mxu0 %v808
  %v951 = vpop.f32.mrf.mxu0
  %v952 = vadd.f32 0.0, %v951
  %v953 = vpop.f32.mrf.mxu0
  %954 = vmatprep.mubr.f32.mxu0 0.0
  %955 = vmatmul.mubr.f32.gmra.mxu0 %v811
  %v956 = vpop.f32.mrf.mxu0
  %v957 = vadd.f32 0.0, %v956
  %v958 = vpop.f32.mrf.mxu0
  %959 = vmatprep.mubr.f32.mxu0 0.0
  %960 = vmatmul.mubr.f32.gmra.mxu0 %v814
  %v961 = vpop.f32.mrf.mxu0
  %v962 = vadd.f32 0.0, %v961
  %v963 = vpop.f32.mrf.mxu0
  %964 = vdwg.mxu0
  %v966 = vsel %vm49, %v751, 0
  %v969 = vsel %vm49, %v752, 0
  %v972 = vsel %vm49, %v753, 0
  %v975 = vsel %vm49, %v754, 0
  %v978 = vsel %vm49, %v755, 0
  %v981 = vsel %vm49, %v756, 0
  %v984 = vsel %vm49, %v757, 0
  %v987 = vsel %vm49, %v758, 0
  %v990 = vsel %vm49, %v759, 0
  %v993 = vsel %vm49, %v760, 0
  %v996 = vsel %vm49, %v761, 0
  %v999 = vsel %vm49, %v762, 0
  %v1002 = vsel %vm49, %v763, 0
  %v1005 = vsel %vm49, %v764, 0
  %v1008 = vsel %vm49, %v765, 0
  %v1011 = vsel %vm49, %v766, 0
  %1013 = vmatprep.subr.mxu0 0.0
  %1014 = vmatpush1.msra.mxu0 0.0
  %1015 = vmatprep.subr.mxu0 0.0
  %1016 = vmatpush1.msra.mxu0 0.0
  %1017 = vmatprep.subr.mxu0 0.0
  %1018 = vmatpush1.msra.mxu0 0.0
  %1019 = vmatprep.subr.mxu0 0.0
  %1020 = vmatpush1.msra.mxu0 0.0
  %1021 = vmatprep.subr.mxu0 0.0
  %1022 = vmatpush1.msra.mxu0 0.0
  %1023 = vmatprep.subr.mxu0 0.0
  %1024 = vmatpush1.msra.mxu0 0.0
  %1025 = vmatprep.subr.mxu0 0.0
  %1026 = vmatpush1.msra.mxu0 0.0
  %1027 = vmatprep.subr.mxu0 0.0
  %1028 = vmatpush1.msra.mxu0 0.0
  %1029 = vmatprep.subr.mxu0 0.0
  %1030 = vmatpush1.msra.mxu0 0.0
  %1031 = vmatprep.subr.mxu0 0.0
  %1032 = vmatpush1.msra.mxu0 0.0
  %1033 = vmatprep.subr.mxu0 0.0
  %1034 = vmatpush1.msra.mxu0 0.0
  %1035 = vmatprep.subr.mxu0 0.0
  %1036 = vmatpush1.msra.mxu0 0.0
  %1037 = vmatprep.subr.mxu0 0.0
  %1038 = vmatpush1.msra.mxu0 0.0
  %1039 = vmatprep.subr.mxu0 0.0
  %1040 = vmatpush1.msra.mxu0 0.0
  %1041 = vmatprep.subr.mxu0 0.0
  %1042 = vmatpush1.msra.mxu0 0.0
  %1043 = vmatprep.subr.mxu0 0.0
  %1044 = vmatpush1.msra.mxu0 %v818
  %1045 = vmatprep.subr.mxu0 0.0
  %1046 = vmatpush2.msra.mxu0 0.0
  %1047 = vmatprep.subr.mxu0 0.0
  %1048 = vmatpush2.msra.mxu0 0.0
  %1049 = vmatprep.subr.mxu0 0.0
  %1050 = vmatpush2.msra.mxu0 0.0
  %1051 = vmatprep.subr.mxu0 0.0
  %1052 = vmatpush2.msra.mxu0 0.0
  %1053 = vmatprep.subr.mxu0 0.0
  %1054 = vmatpush2.msra.mxu0 0.0
  %1055 = vmatprep.subr.mxu0 0.0
  %1056 = vmatpush2.msra.mxu0 0.0
  %1057 = vmatprep.subr.mxu0 0.0
  %1058 = vmatpush2.msra.mxu0 0.0
  %1059 = vmatprep.subr.mxu0 0.0
  %1060 = vmatpush2.msra.mxu0 0.0
  %1061 = vmatprep.subr.mxu0 0.0
  %1062 = vmatpush2.msra.mxu0 0.0
  %1063 = vmatprep.subr.mxu0 0.0
  %1064 = vmatpush2.msra.mxu0 0.0
  %1065 = vmatprep.subr.mxu0 0.0
  %1066 = vmatpush2.msra.mxu0 0.0
  %1067 = vmatprep.subr.mxu0 0.0
  %1068 = vmatpush2.msra.mxu0 0.0
  %1069 = vmatprep.subr.mxu0 0.0
  %1070 = vmatpush2.msra.mxu0 0.0
  %1071 = vmatprep.subr.mxu0 0.0
  %1072 = vmatpush2.msra.mxu0 0.0
  %1073 = vmatprep.subr.mxu0 0.0
  %1074 = vmatpush2.msra.mxu0 0.0
  %1075 = vmatprep.subr.mxu0 0.0
  %1076 = vmatpush2.msra.mxu0 0.0
  %1077 = vmatprep.mubr.f32.mxu0 0.0
  %1078 = vmatmul.mubr.f32.gmra.mxu0 %v966
  %v1079 = vpop.f32.mrf.mxu0
  %v1080 = vadd.f32 0.0, %v1079
  %v1081 = vpop.f32.mrf.mxu0
  %1082 = vmatprep.mubr.f32.mxu0 0.0
  %1083 = vmatmul.mubr.f32.gmra.mxu0 %v969
  %v1084 = vpop.f32.mrf.mxu0
  %v1085 = vadd.f32 0.0, %v1084
  %v1086 = vpop.f32.mrf.mxu0
  %1087 = vmatprep.mubr.f32.mxu0 0.0
  %1088 = vmatmul.mubr.f32.gmra.mxu0 %v972
  %v1089 = vpop.f32.mrf.mxu0
  %v1090 = vadd.f32 0.0, %v1089
  %v1091 = vpop.f32.mrf.mxu0
  %1092 = vmatprep.mubr.f32.mxu0 0.0
  %1093 = vmatmul.mubr.f32.gmra.mxu0 %v975
  %v1094 = vpop.f32.mrf.mxu0
  %v1095 = vadd.f32 0.0, %v1094
  %v1096 = vpop.f32.mrf.mxu0
  %1097 = vmatprep.mubr.f32.mxu0 0.0
  %1098 = vmatmul.mubr.f32.gmra.mxu0 %v978
  %v1099 = vpop.f32.mrf.mxu0
  %v1100 = vadd.f32 0.0, %v1099
  %v1101 = vpop.f32.mrf.mxu0
  %1102 = vmatprep.mubr.f32.mxu0 0.0
  %1103 = vmatmul.mubr.f32.gmra.mxu0 %v981
  %v1104 = vpop.f32.mrf.mxu0
  %v1105 = vadd.f32 0.0, %v1104
  %v1106 = vpop.f32.mrf.mxu0
  %1107 = vmatprep.mubr.f32.mxu0 0.0
  %1108 = vmatmul.mubr.f32.gmra.mxu0 %v984
  %v1109 = vpop.f32.mrf.mxu0
  %v1110 = vadd.f32 0.0, %v1109
  %v1111 = vpop.f32.mrf.mxu0
  %1112 = vmatprep.mubr.f32.mxu0 0.0
  %1113 = vmatmul.mubr.f32.gmra.mxu0 %v987
  %v1114 = vpop.f32.mrf.mxu0
  %v1115 = vadd.f32 0.0, %v1114
  %v1116 = vpop.f32.mrf.mxu0
  %1117 = vmatprep.mubr.f32.mxu0 0.0
  %1118 = vmatmul.mubr.f32.gmra.mxu0 %v990
  %v1119 = vpop.f32.mrf.mxu0
  %v1120 = vadd.f32 0.0, %v1119
  %v1121 = vpop.f32.mrf.mxu0
  %1122 = vmatprep.mubr.f32.mxu0 0.0
  %1123 = vmatmul.mubr.f32.gmra.mxu0 %v993
  %v1124 = vpop.f32.mrf.mxu0
  %v1125 = vadd.f32 0.0, %v1124
  %v1126 = vpop.f32.mrf.mxu0
  %1127 = vmatprep.mubr.f32.mxu0 0.0
  %1128 = vmatmul.mubr.f32.gmra.mxu0 %v996
  %v1129 = vpop.f32.mrf.mxu0
  %v1130 = vadd.f32 0.0, %v1129
  %v1131 = vpop.f32.mrf.mxu0
  %1132 = vmatprep.mubr.f32.mxu0 0.0
  %1133 = vmatmul.mubr.f32.gmra.mxu0 %v999
  %v1134 = vpop.f32.mrf.mxu0
  %v1135 = vadd.f32 0.0, %v1134
  %v1136 = vpop.f32.mrf.mxu0
  %1137 = vmatprep.mubr.f32.mxu0 0.0
  %1138 = vmatmul.mubr.f32.gmra.mxu0 %v1002
  %v1139 = vpop.f32.mrf.mxu0
  %v1140 = vadd.f32 0.0, %v1139
  %v1141 = vpop.f32.mrf.mxu0
  %1142 = vmatprep.mubr.f32.mxu0 0.0
  %1143 = vmatmul.mubr.f32.gmra.mxu0 %v1005
  %v1144 = vpop.f32.mrf.mxu0
  %v1145 = vadd.f32 0.0, %v1144
  %v1146 = vpop.f32.mrf.mxu0
  %1147 = vmatprep.mubr.f32.mxu0 0.0
  %1148 = vmatmul.mubr.f32.gmra.mxu0 %v1008
  %v1149 = vpop.f32.mrf.mxu0
  %v1150 = vadd.f32 0.0, %v1149
  %v1151 = vpop.f32.mrf.mxu0
  %1152 = vmatprep.mubr.f32.mxu0 0.0
  %1153 = vmatmul.mubr.f32.gmra.mxu0 %v1011
  %v1154 = vpop.f32.mrf.mxu0
  %v1155 = vadd.f32 0.0, %v1154
  %v1156 = vpop.f32.mrf.mxu0
  %1157 = vdwg.mxu0
  %v1158 = vsub.f32 %v303, %v887
  %v1159 = vsub.f32 %v306, %v892
  %v1160 = vsub.f32 %v311, %v897
  %v1161 = vsub.f32 %v314, %v902
  %v1162 = vsub.f32 %v319, %v907
  %v1163 = vsub.f32 %v322, %v912
  %v1164 = vsub.f32 %v327, %v917
  %v1165 = vsub.f32 %v330, %v922
  %v1166 = vsub.f32 %v335, %v927
  %v1167 = vsub.f32 %v338, %v932
  %v1168 = vsub.f32 %v343, %v937
  %v1169 = vsub.f32 %v346, %v942
  %v1170 = vsub.f32 %v351, %v947
  %v1171 = vsub.f32 %v354, %v952
  %v1172 = vsub.f32 %v359, %v957
  %v1173 = vsub.f32 %v362, %v962
  %v1174 = vmul.f32 %v1158, %v1080
  %v1175 = vmul.f32 %v1159, %v1085
  %v1176 = vmul.f32 %v1160, %v1090
  %v1177 = vmul.f32 %v1161, %v1095
  %v1178 = vmul.f32 %v1162, %v1100
  %v1179 = vmul.f32 %v1163, %v1105
  %v1180 = vmul.f32 %v1164, %v1110
  %v1181 = vmul.f32 %v1165, %v1115
  %v1182 = vmul.f32 %v1166, %v1120
  %v1183 = vmul.f32 %v1167, %v1125
  %v1184 = vmul.f32 %v1168, %v1130
  %v1185 = vmul.f32 %v1169, %v1135
  %v1186 = vmul.f32 %v1170, %v1140
  %v1187 = vmul.f32 %v1171, %v1145
  %v1188 = vmul.f32 %v1172, %v1150
  %v1189 = vmul.f32 %v1173, %v1155
  %v1190 = vld [vmem:[%s5 + $0x2] sm:$0x1]
  %v1191 = vlaneseq
  %v1192 = vshrl.u32 %v1191, 7
  %v1193 = vsub.s32 0, %v1192
  %v1194 = vrot.slane %v1190, %v1193
  %v1195 = vmul.f32 %v1174, %v1194
  %v1196 = vmul.f32 %v1175, %v1194
  %v1197 = vmul.f32 %v1176, %v1194
  %v1198 = vmul.f32 %v1177, %v1194
  %v1199 = vmul.f32 %v1178, %v1194
  %v1200 = vmul.f32 %v1179, %v1194
  %v1201 = vmul.f32 %v1180, %v1194
  %v1202 = vmul.f32 %v1181, %v1194
  %v1203 = vmul.f32 %v1182, %v1194
  %v1204 = vmul.f32 %v1183, %v1194
  %v1205 = vmul.f32 %v1184, %v1194
  %v1206 = vmul.f32 %v1185, %v1194
  %v1207 = vmul.f32 %v1186, %v1194
  %v1208 = vmul.f32 %v1187, %v1194
  %v1209 = vmul.f32 %v1188, %v1194
  %v1210 = vmul.f32 %v1189, %v1194
  %v1211 = vld [vmem:[%s5 + $0x3] sm:$0x1]
  %v1212 = vlaneseq
  %v1213 = vshrl.u32 %v1212, 7
  %v1214 = vsub.s32 0, %v1213
  %v1215 = vrot.slane %v1211, %v1214
  %v1216 = vadd.f32 %v1195, %v1215
  %v1217 = vadd.f32 %v1196, %v1215
  %v1218 = vadd.f32 %v1197, %v1215
  %v1219 = vadd.f32 %v1198, %v1215
  %v1220 = vadd.f32 %v1199, %v1215
  %v1221 = vadd.f32 %v1200, %v1215
  %v1222 = vadd.f32 %v1201, %v1215
  %v1223 = vadd.f32 %v1202, %v1215
  %v1224 = vadd.f32 %v1203, %v1215
  %v1225 = vadd.f32 %v1204, %v1215
  %v1226 = vadd.f32 %v1205, %v1215
  %v1227 = vadd.f32 %v1206, %v1215
  %v1228 = vadd.f32 %v1207, %v1215
  %v1229 = vadd.f32 %v1208, %v1215
  %v1230 = vadd.f32 %v1209, %v1215
  %v1231 = vadd.f32 %v1210, %v1215
  %1232 = vst [vmem:[%s6] sm:$0xff] %v1216
  %1233 = vst [vmem:[%s6 + $0x8] sm:$0xff] %v1217
  %1234 = vst [vmem:[%s6 + $0x10] sm:$0xff] %v1218
  %1235 = vst [vmem:[%s6 + $0x18] sm:$0xff] %v1219
  %1236 = vst [vmem:[%s6 + $0x20] sm:$0xff] %v1220
  %1237 = vst [vmem:[%s6 + $0x28] sm:$0xff] %v1221
  %1238 = vst [vmem:[%s6 + $0x30] sm:$0xff] %v1222
  %1239 = vst [vmem:[%s6 + $0x38] sm:$0xff] %v1223
  %1240 = vst [vmem:[%s6 + $0x40] sm:$0xff] %v1224
  %1241 = vst [vmem:[%s6 + $0x48] sm:$0xff] %v1225
  %1242 = vst [vmem:[%s6 + $0x50] sm:$0xff] %v1226
  %1243 = vst [vmem:[%s6 + $0x58] sm:$0xff] %v1227
  %1244 = vst [vmem:[%s6 + $0x60] sm:$0xff] %v1228
  %1245 = vst [vmem:[%s6 + $0x68] sm:$0xff] %v1229
  %1246 = vst [vmem:[%s6 + $0x70] sm:$0xff] %v1230
  %1247 = vst [vmem:[%s6 + $0x78] sm:$0xff] %v1231
  // Predicated region
  $region26: #{continuous_value_encoder.1} parent=0 // pred_check
    _
  $region27: #{continuous_value_encoder.1} parent=0 // pred_check_branch
    %1249 = sbr.rel (0) target = $region29
  $region28: #{continuous_value_encoder.1} parent=0 // pred_region
    _
  $region29: #{continuous_value_encoder.1} parent=0 // pred_fallthru
    _
  // Predicated region
  $region30: #{continuous_value_encoder.1} parent=0 // pred_check
    _
  $region31: #{continuous_value_encoder.1} parent=0 // pred_check_branch
    %1251 = sbr.rel (0) target = $region33
  $region32: #{continuous_value_encoder.1} parent=0 // pred_region
    _
  $region33: #{continuous_value_encoder.1} parent=0 // pred_fallthru
    _

</llo_original>
